<compile_context>
chip_gen: v7x
topology: tpu7x:2x2x1
jax: 0.10.0
libtpu: 0.0.40
codegen_flags: <defaults>
</compile_context>

<pallas_src>
import jax
import jax.numpy as jnp
from jax.experimental import pallas as pl
from jax.experimental.pallas import tpu as pltpu


_SUBLANE = 8


def _transition_down_kernel(x_ref, w_ref, shift_ref, o_ref):
    # x_ref:     (TN, C_in)    bf16 tile of point features
    # w_ref:     (C_in, C_out) bf16 weight with BN scale folded in
    # shift_ref: (1, C_out)    f32 BN shift = beta - mean * scale
    # o_ref:     (TN, C_out)   f32 output tile
    y = jnp.dot(x_ref[...], w_ref[...], preferred_element_type=jnp.float32)
    y = y + shift_ref[...]
    o_ref[...] = jnp.maximum(y, 0.0).astype(o_ref.dtype)


def _pick_tile_n(n, c_in, c_out, vmem_budget=24 * 1024 * 1024):
    """Largest power-of-two N-tile that (a) keeps the double-buffered working
    set inside a conservative scoped-VMEM budget and (b) leaves >= 2 grid
    steps when there is enough work (megacore sharding on multi-TC chips)."""

    def step_bytes(t):
        x_b = 2 * t * c_in * 2          # bf16 activations, double-buffered
        o_b = 2 * t * c_out * 4         # f32 output, double-buffered
        w_b = 2 * c_in * c_out * 2      # bf16 weight (counted at 2 bufs, safe)
        s_b = 2 * _SUBLANE * c_out * 4  # shift row (+ slack)
        return x_b + o_b + w_b + s_b

    t = 2048
    while t > _SUBLANE and step_bytes(t) > vmem_budget:
        t //= 2
    # Keep at least 2 grid steps when N allows it so the "parallel" N axis can
    # be split across TensorCores (v7x has 2 TCs/chip).
    while t > _SUBLANE and pl.cdiv(n, t) < 2:
        t //= 2
    return max(t, _SUBLANE)


def transition_down_stride1(x, w, gamma, beta, running_mean, running_var,
                            eps=1e-5, tile_n=None, out_dtype=jnp.float32):
    """relu(batchnorm_eval(x @ w.T)) fused in one Pallas kernel.

    x: (N, C_in) float32 packed point features
    w: (C_out, C_in) float32 (nn.Linear weight layout, no bias)
    """
    N, C_in = x.shape
    C_out = w.shape[0]

    # Fold eval-mode BN into the linear:  relu(bn(x @ W^T)) == relu(x @ Ws + shift)
    scale = gamma / jnp.sqrt(running_var + eps)                       # (C_out,) f32
    shift = (beta - running_mean * scale).reshape(1, C_out)           # (1, C_out) f32
    shift = shift.astype(jnp.float32)
    wt = (w.T * scale[None, :]).astype(jnp.bfloat16)                  # (C_in, C_out) bf16
    xb = x.astype(jnp.bfloat16)                                       # bf16 stream, f32 accumulate

    if tile_n is None:
        tile_n = _pick_tile_n(N, C_in, C_out)
    n_tiles = pl.cdiv(N, tile_n)
    n_pad = n_tiles * tile_n
    if n_pad != N:
        xb = jnp.pad(xb, ((0, n_pad - N), (0, 0)))                    # ragged last tile

    cost = pl.CostEstimate(
        flops=2 * n_pad * C_in * C_out,
        transcendentals=0,
        bytes_accessed=(n_pad * C_in * 2          # x read (bf16)
                        + C_in * C_out * 2        # weight read (bf16)
                        + C_out * 4               # shift read
                        + n_pad * C_out * 4),     # output write (f32)
    )

    def run(single_buffer_invariants):
        # Weight / shift are grid-invariant (index_map -> (0, 0) every step);
        # single-buffering them frees VMEM for larger N tiles.
        inv_kwargs = (dict(pipeline_mode=pl.Buffered(1))
                      if single_buffer_invariants else {})
        grid_spec = pltpu.PrefetchScalarGridSpec(
            num_scalar_prefetch=0,
            grid=(n_tiles,),
            in_specs=[
                pl.BlockSpec((tile_n, C_in), lambda i: (i, 0)),
                pl.BlockSpec((C_in, C_out), lambda i: (0, 0), **inv_kwargs),
                pl.BlockSpec((1, C_out), lambda i: (0, 0), **inv_kwargs),
            ],
            out_specs=pl.BlockSpec((tile_n, C_out), lambda i: (i, 0)),
        )
        return pl.pallas_call(
            _transition_down_kernel,
            out_shape=jax.ShapeDtypeStruct((n_pad, C_out), out_dtype),
            grid_spec=grid_spec,
            compiler_params=pltpu.CompilerParams(
                dimension_semantics=("parallel",),
                vmem_limit_bytes=32 << 20),
            cost_estimate=cost,
        )(xb, wt, shift)

    try:
        out = run(True)
    except Exception:
        # Older / stricter jax versions without single-buffered pipeline_mode:
        # fall back to default double buffering (identical numerics).
        out = run(False)

    return out[:N] if n_pad != N else out


def transition_down_forward(pxo, params):
    """Mirrors TransitionDown.forward for stride == 1: returns [p, x_new, o]."""
    p, x, o = pxo
    x_new = transition_down_stride1(
        x, params["w"], params["gamma"], params["beta"],
        params["running_mean"], params["running_var"])
    return [p, x_new, o]


if __name__ == "__main__":
    key = jax.random.PRNGKey(0)
    k_p, k_x, k_w, k_g, k_b, k_m, k_v = jax.random.split(key, 7)

    in_planes, out_planes = 32, 64
    N = 200                      # deliberately NOT a tile multiple -> exercises padding path
    # Point-transformer packed-batch convention: coords p (N,3), feats x (N,C),
    # offsets o (cumulative point counts per batch element).
    p = jax.random.normal(k_p, (N, 3), dtype=jnp.float32)
    x = jax.random.normal(k_x, (N, in_planes), dtype=jnp.float32)
    o = jnp.array([96, 200], dtype=jnp.int32)

    bound = 1.0 / (in_planes ** 0.5)
    params = {
        "w": jax.random.uniform(k_w, (out_planes, in_planes),
                                dtype=jnp.float32, minval=-bound, maxval=bound),
        "gamma": 0.5 + jax.random.uniform(k_g, (out_planes,), dtype=jnp.float32),
        "beta": 0.1 * jax.random.normal(k_b, (out_planes,), dtype=jnp.float32),
        "running_mean": 0.1 * jax.random.normal(k_m, (out_planes,), dtype=jnp.float32),
        "running_var": 0.5 + jax.random.uniform(k_v, (out_planes,), dtype=jnp.float32),
    }

    p_out, x_out, o_out = transition_down_forward((p, x, o), params)
    x_out = jax.block_until_ready(x_out)

    # References (eval-mode BN folded into an affine).
    eps = 1e-5
    scale = params["gamma"] / jnp.sqrt(params["running_var"] + eps)
    shift = params["beta"] - params["running_mean"] * scale
    # (a) reference matching the kernel's bf16 input / f32 accumulate path
    wt_bf = (params["w"].T * scale[None, :]).astype(jnp.bfloat16).astype(jnp.float32)
    x_bf = x.astype(jnp.bfloat16).astype(jnp.float32)
    ref_bf = jnp.maximum(x_bf @ wt_bf + shift[None, :], 0.0)
    # (b) full-precision reference of the original module semantics
    ref_f32 = jnp.maximum((x @ params["w"].T) * scale[None, :] + shift[None, :], 0.0)

    assert x_out.shape == (N, out_planes)
    assert jnp.allclose(x_out, ref_bf, atol=1e-4, rtol=1e-3)
    assert jnp.allclose(x_out, ref_f32, atol=5e-2, rtol=5e-2)

    print("KERNEL_OK")
</pallas_src>

<mosaic_0001>
module attributes {stable_mosaic.version = 11 : i64} {
  func.func @_transition_down_kernel(%arg0: i32, %arg1: memref<128x32xbf16, #tpu.memory_space<vmem>>, %arg2: memref<32x64xbf16, #tpu.memory_space<vmem>>, %arg3: memref<1x64xf32, #tpu.memory_space<vmem>>, %arg4: memref<128x64xf32, #tpu.memory_space<vmem>>) attributes {dimension_semantics = [#tpu.dimension_semantics<parallel>], iteration_bounds = array<i64: 2>, scalar_prefetch = 0 : i64, scratch_operands = 0 : i64, tpu.core_type = #tpu.core_type<tc>, window_params = [{transform_indices = @transform_0, window_bounds = array<i64: 128, 32>}, {pipeline_mode = #tpu.pipeline_mode<synchronous>, transform_indices = @transform_1, window_bounds = array<i64: 32, 64>}, {pipeline_mode = #tpu.pipeline_mode<synchronous>, transform_indices = @transform_2, window_bounds = array<i64: 1, 64>}, {transform_indices = @transform_3, window_bounds = array<i64: 128, 64>}]} {
    %c0 = arith.constant 0 : index
    %c0_0 = arith.constant 0 : index
    %0 = vector.load %arg1[%c0, %c0_0] : memref<128x32xbf16, #tpu.memory_space<vmem>>, vector<128x32xbf16>
    %c0_1 = arith.constant 0 : index
    %c0_2 = arith.constant 0 : index
    %1 = vector.load %arg2[%c0_1, %c0_2] : memref<32x64xbf16, #tpu.memory_space<vmem>>, vector<32x64xbf16>
    %cst = arith.constant dense<0.000000e+00> : vector<128x64xf32>
    %2 = tpu.matmul %0, %1, %cst {dimension_numbers = #tpu.dot_dimension_numbers<[1], [0], [0], [1], [0, 0, 1, 1], [], []>} : vector<128x32xbf16>, vector<32x64xbf16>, vector<128x64xf32> -> vector<128x64xf32>
    %c0_3 = arith.constant 0 : index
    %c0_4 = arith.constant 0 : index
    %3 = vector.load %arg3[%c0_3, %c0_4] : memref<1x64xf32, #tpu.memory_space<vmem>>, vector<1x64xf32>
    %4 = vector.broadcast %3 : vector<1x64xf32> to vector<128x64xf32>
    %5 = arith.addf %2, %4 : vector<128x64xf32>
    %cst_5 = arith.constant 0.000000e+00 : f32
    %6 = vector.broadcast %cst_5 : f32 to vector<128x64xf32>
    %7 = arith.maximumf %5, %6 : vector<128x64xf32>
    %c0_6 = arith.constant 0 : index
    %c0_7 = arith.constant 0 : index
    %8 = vector.load %arg4[%c0_6, %c0_7] : memref<128x64xf32, #tpu.memory_space<vmem>>, vector<128x64xf32>
    tpu.vector_store %arg4[%c0_6, %c0_7], %7 {strides = array<i32>} : memref<128x64xf32, #tpu.memory_space<vmem>>, vector<128x64xf32>,
    return
  }
  func.func @transform_0(%arg0: i32) -> (i32, i32) {
    %c0_i32 = arith.constant 0 : i32
    %c0_i32_0 = arith.constant 0 : i32
    return %arg0, %c0_i32 : i32, i32
  }
  func.func @transform_1(%arg0: i32) -> (i32, i32) {
    %c0_i32 = arith.constant 0 : i32
    %c0_i32_0 = arith.constant 0 : i32
    %c0_i32_1 = arith.constant 0 : i32
    return %c0_i32, %c0_i32_0 : i32, i32
  }
  func.func @transform_2(%arg0: i32) -> (i32, i32) {
    %c0_i32 = arith.constant 0 : i32
    %c0_i32_0 = arith.constant 0 : i32
    %c0_i32_1 = arith.constant 0 : i32
    return %c0_i32, %c0_i32_0 : i32, i32
  }
  func.func @transform_3(%arg0: i32) -> (i32, i32) {
    %c0_i32 = arith.constant 0 : i32
    %c0_i32_0 = arith.constant 0 : i32
    return %arg0, %c0_i32 : i32, i32
  }
}

module attributes {stable_mosaic.version = 11 : i64} {
  func.func @_transition_down_kernel(%arg0: i32, %arg1: memref<128x32xbf16, #tpu.memory_space<vmem>>, %arg2: memref<32x64xbf16, #tpu.memory_space<vmem>>, %arg3: memref<1x64xf32, #tpu.memory_space<vmem>>, %arg4: memref<128x64xf32, #tpu.memory_space<vmem>>) attributes {dimension_semantics = [#tpu.dimension_semantics<parallel>], iteration_bounds = array<i64: 2>, scalar_prefetch = 0 : i64, scratch_operands = 0 : i64, tpu.core_type = #tpu.core_type<tc>, window_params = [{transform_indices = @transform_0, window_bounds = array<i64: 128, 32>}, {pipeline_mode = #tpu.pipeline_mode<synchronous>, transform_indices = @transform_1, window_bounds = array<i64: 32, 64>}, {pipeline_mode = #tpu.pipeline_mode<synchronous>, transform_indices = @transform_2, window_bounds = array<i64: 1, 64>}, {transform_indices = @transform_3, window_bounds = array<i64: 128, 64>}]} {
    %c0 = arith.constant 0 : index
    %c0_0 = arith.constant 0 : index
    %0 = vector.load %arg1[%c0, %c0_0] : memref<128x32xbf16, #tpu.memory_space<vmem>>, vector<128x32xbf16>
    %c0_1 = arith.constant 0 : index
    %c0_2 = arith.constant 0 : index
    %1 = vector.load %arg2[%c0_1, %c0_2] : memref<32x64xbf16, #tpu.memory_space<vmem>>, vector<32x64xbf16>
    %cst = arith.constant dense<0.000000e+00> : vector<128x64xf32>
    %2 = tpu.matmul %0, %1, %cst {dimension_numbers = #tpu.dot_dimension_numbers<[1], [0], [0], [1], [0, 0, 1, 1], [], []>} : vector<128x32xbf16>, vector<32x64xbf16>, vector<128x64xf32> -> vector<128x64xf32>
    %c0_3 = arith.constant 0 : index
    %c0_4 = arith.constant 0 : index
    %3 = vector.load %arg3[%c0_3, %c0_4] : memref<1x64xf32, #tpu.memory_space<vmem>>, vector<1x64xf32>
    %4 = vector.broadcast %3 : vector<1x64xf32> to vector<128x64xf32>
    %5 = arith.addf %2, %4 : vector<128x64xf32>
    %cst_5 = arith.constant 0.000000e+00 : f32
    %6 = vector.broadcast %cst_5 : f32 to vector<128x64xf32>
    %7 = arith.maximumf %5, %6 : vector<128x64xf32>
    %c0_6 = arith.constant 0 : index
    %c0_7 = arith.constant 0 : index
    %8 = vector.load %arg4[%c0_6, %c0_7] : memref<128x64xf32, #tpu.memory_space<vmem>>, vector<128x64xf32>
    tpu.vector_store %arg4[%c0_6, %c0_7], %7 {strides = array<i32>} : memref<128x64xf32, #tpu.memory_space<vmem>>, vector<128x64xf32>,
    return
  }
  func.func @transform_0(%arg0: i32) -> (i32, i32) {
    %c0_i32 = arith.constant 0 : i32
    %c0_i32_0 = arith.constant 0 : i32
    return %arg0, %c0_i32 : i32, i32
  }
  func.func @transform_1(%arg0: i32) -> (i32, i32) {
    %c0_i32 = arith.constant 0 : i32
    %c0_i32_0 = arith.constant 0 : i32
    %c0_i32_1 = arith.constant 0 : i32
    return %c0_i32, %c0_i32_0 : i32, i32
  }
  func.func @transform_2(%arg0: i32) -> (i32, i32) {
    %c0_i32 = arith.constant 0 : i32
    %c0_i32_0 = arith.constant 0 : i32
    %c0_i32_1 = arith.constant 0 : i32
    return %c0_i32, %c0_i32_0 : i32, i32
  }
  func.func @transform_3(%arg0: i32) -> (i32, i32) {
    %c0_i32 = arith.constant 0 : i32
    %c0_i32_0 = arith.constant 0 : i32
    return %arg0, %c0_i32 : i32, i32
  }
}

</mosaic_0001>

<llo_original>
// kernel: tpu_custom_call.1
$region0: #{tpu_custom_call.1}
  #allocation0 [shape = 'u32[]', space=smem, size = 0x4, offset = 0x4, fixed_abs, tag = 'smem constant byte address 0x4 - core index']
  #allocation1 [shape = 'u32[144,128]{1,0:T(1,128)}', space=vmem, size = 0x12000, scoped, tag = 'internal scratch']
  %s0 = inlined_call_operand.vmem [shape: bf16[256,32], index: 0, kind: input, shape index: {}]
  %s1 = inlined_call_operand.vmem [shape: bf16[32,64], index: 1, kind: input, shape index: {}]
  %s2 = inlined_call_operand.vmem [shape: f32[1,64], index: 2, kind: input, shape index: {}]
  %s3 = inlined_call_operand.vmem [shape: f32[256,64], index: 3, kind: output, shape index: {}]
  %s4 = sld [smem:[#allocation0]]
  $region45: #{tpu_custom_call.1} parent=0
    _
  %s6 = ssub.s32 1, %s4
  %s7 = scalar_select 0, %s6, %s4
  loop: start=0, step=1, limit=4
  $region2: #{tpu_custom_call.1} parent=0 // loop_pre_header
    _
  $region3: #{tpu_custom_call.1} parent=0 // loop_header
    %s9 = sphi 0, %s13
    %p10 = scmp.ge.s32.totalorder %s9, 4
    %s19 = sphi 0, %s21
    %s22 = sphi 0, %s19
    %s23 = sphi 0, %s22
    %s39 = sphi 0, %s23
    %s43 = sphi 0, %s43
    %s45 = sphi 0, %s43
    %s46 = sphi 0, %s45
    %s60 = sphi 0, %s46
    %s64 = sphi 0, %s64
    %s66 = sphi 0, %s64
    %s67 = sphi 0, %s66
    %s81 = sphi 0, %s67
    %s87 = sphi 0, %s89
    %s90 = sphi 0, %s87
    %s91 = sphi 0, %s90
    %s107 = sphi 0, %s91
  $region4: #{tpu_custom_call.1} parent=0 // loop_header_branch
    %12 = sbr.rel (%p10) target = $region8
  $region5: #{tpu_custom_call.1} parent=0 // loop_body
    %s14 = ssub.s32 %s9, 1
    %s15 = ssub.s32 %s9, 2
    %s16 = sadd.s32 %s9, 1
    %s17 = ssub.s32 %s9, %s16
    %p18 = scmp.eq.s32.totalorder %s17, 0
    %s20 = sadd.s32 %s19, 1
    %s21 = scalar_select %p18, %s19, %s20
    %p24 = pneg %p18
    %p25 = scmp.eq.s32.totalorder %s9, 1
    %p26 = por %p24, %p25
    %p27 = scmp.ne.s32.totalorder %s19, %s22
    %p28 = scmp.eq.s32.totalorder %s9, 0
    %p29 = por %p27, %p28
    %p30 = scmp.ne.s32.totalorder %s19, %s22
    %p31 = scmp.eq.s32.totalorder %s14, 1
    %p32 = por %p30, %p31
    %p33 = scmp.ne.s32.totalorder %s22, %s23
    %p34 = scmp.eq.s32.totalorder %s14, 0
    %p35 = por %p33, %p34
    %p36 = scmp.ne.s32.totalorder %s22, %s23
    %p37 = scmp.eq.s32.totalorder %s15, 1
    %p38 = por %p36, %p37
    %p40 = scmp.ne.s32.totalorder %s23, %s39
    %p41 = scmp.eq.s32.totalorder %s15, 0
    %p42 = por %p40, %p41
    %s44 = sadd.s32 %s43, 1
    %p47 = scmp.eq.s32.totalorder %s9, 1
    %p48 = scmp.ne.s32.totalorder %s43, %s45
    %p49 = scmp.eq.s32.totalorder %s9, 0
    %p50 = por %p48, %p49
    %p51 = scmp.ne.s32.totalorder %s43, %s45
    %p52 = scmp.eq.s32.totalorder %s14, 1
    %p53 = por %p51, %p52
    %p54 = scmp.ne.s32.totalorder %s45, %s46
    %p55 = scmp.eq.s32.totalorder %s14, 0
    %p56 = por %p54, %p55
    %p57 = scmp.ne.s32.totalorder %s45, %s46
    %p58 = scmp.eq.s32.totalorder %s15, 1
    %p59 = por %p57, %p58
    %p61 = scmp.ne.s32.totalorder %s46, %s60
    %p62 = scmp.eq.s32.totalorder %s15, 0
    %p63 = por %p61, %p62
    %s65 = sadd.s32 %s64, 1
    %p68 = scmp.eq.s32.totalorder %s9, 1
    %p69 = scmp.ne.s32.totalorder %s64, %s66
    %p70 = scmp.eq.s32.totalorder %s9, 0
    %p71 = por %p69, %p70
    %p72 = scmp.ne.s32.totalorder %s64, %s66
    %p73 = scmp.eq.s32.totalorder %s14, 1
    %p74 = por %p72, %p73
    %p75 = scmp.ne.s32.totalorder %s66, %s67
    %p76 = scmp.eq.s32.totalorder %s14, 0
    %p77 = por %p75, %p76
    %p78 = scmp.ne.s32.totalorder %s66, %s67
    %p79 = scmp.eq.s32.totalorder %s15, 1
    %p80 = por %p78, %p79
    %p82 = scmp.ne.s32.totalorder %s67, %s81
    %p83 = scmp.eq.s32.totalorder %s15, 0
    %p84 = por %p82, %p83
    %s85 = ssub.s32 %s9, %s16
    %p86 = scmp.eq.s32.totalorder %s85, 0
    %s88 = sadd.s32 %s87, 1
    %s89 = scalar_select %p86, %s87, %s88
    %p92 = pneg %p86
    %p93 = scmp.eq.s32.totalorder %s9, 1
    %p94 = por %p92, %p93
    %p95 = scmp.ne.s32.totalorder %s87, %s90
    %p96 = scmp.eq.s32.totalorder %s9, 0
    %p97 = por %p95, %p96
    %p98 = scmp.ne.s32.totalorder %s87, %s90
    %p99 = scmp.eq.s32.totalorder %s14, 1
    %p100 = por %p98, %p99
    %p101 = scmp.ne.s32.totalorder %s90, %s91
    %p102 = scmp.eq.s32.totalorder %s14, 0
    %p103 = por %p101, %p102
    %p104 = scmp.ne.s32.totalorder %s90, %s91
    %p105 = scmp.eq.s32.totalorder %s15, 1
    %p106 = por %p104, %p105
    %p108 = scmp.ne.s32.totalorder %s91, %s107
    %p109 = scmp.eq.s32.totalorder %s15, 0
    %p110 = por %p108, %p109
    %p111 = scmp.le.s32.totalorder 1, %s9
    %p112 = scmp.lt.s32.totalorder %s9, 3
    %p113 = pnand %p111, %p112
    %p114 = pneg %p113
    // Predicated region
    $region9: #{tpu_custom_call.1} parent=5 // pred_check
      _
    $region10: #{tpu_custom_call.1} parent=5 // pred_check_branch
      %116 = sbr.rel (%p113) target = $region12
    $region11: #{tpu_custom_call.1} parent=5 // pred_region
      %s117 = ssub.s32 %s9, 1
      // Predicated region
      $region13: #{tpu_custom_call.1} parent=11 // pred_check
        %p118 = pneg %p56
      $region14: #{tpu_custom_call.1} parent=11 // pred_check_branch
        %120 = sbr.rel (%p118) target = $region16
      $region15: #{tpu_custom_call.1} parent=11 // pred_region
        _
      $region16: #{tpu_custom_call.1} parent=11 // pred_fallthru
        _
      // Predicated region
      $region17: #{tpu_custom_call.1} parent=11 // pred_check
        %p121 = pneg %p77
      $region18: #{tpu_custom_call.1} parent=11 // pred_check_branch
        %123 = sbr.rel (%p121) target = $region20
      $region19: #{tpu_custom_call.1} parent=11 // pred_region
        _
      $region20: #{tpu_custom_call.1} parent=11 // pred_fallthru
        _
    $region12: #{tpu_custom_call.1} parent=5 // pred_fallthru
      _
    %p124 = scmp.lt.s32.totalorder %s9, 2
    // Predicated region
    $region21: #{tpu_custom_call.1} parent=5 // pred_check
      %p125 = pneg %p124
    $region22: #{tpu_custom_call.1} parent=5 // pred_check_branch
      %127 = sbr.rel (%p125) target = $region24
    $region23: #{tpu_custom_call.1} parent=5 // pred_region
      // Predicated region
      $region25: #{tpu_custom_call.1} parent=23 // pred_check
        %p128 = pneg %p29
      $region26: #{tpu_custom_call.1} parent=23 // pred_check_branch
        %130 = sbr.rel (%p128) target = $region28
      $region27: #{tpu_custom_call.1} parent=23 // pred_region
        %s131 = smul.u32 16, %s9
        %p132 = scmp.lt.s32.totalorder %s131, 31
        %s133 = scalar_select %p132, %s131, 31
        %s134 = smul.addr %s133, 4
        %s135 = scalar_lea.vmem %s0, %s134
        %s136 = smul.u32 16, %s9
      $region28: #{tpu_custom_call.1} parent=23 // pred_fallthru
        _
    $region24: #{tpu_custom_call.1} parent=5 // pred_fallthru
      _
    %p137 = scmp.le.s32.totalorder 1, %s9
    %p138 = scmp.lt.s32.totalorder %s9, 3
    %p139 = pnand %p137, %p138
    %p140 = pneg %p139
    // Predicated region
    $region29: #{tpu_custom_call.1} parent=5 // pred_check
      _
    $region30: #{tpu_custom_call.1} parent=5 // pred_check_branch
      %142 = sbr.rel (%p139) target = $region32
    $region31: #{tpu_custom_call.1} parent=5 // pred_region
      %s143 = ssub.s32 %s9, 1
      %s144 = smul.u32 16, %s14
      %p145 = scmp.lt.s32.totalorder %s144, 31
      %s146 = scalar_select %p145, %s144, 31
      %s147 = smul.addr %s146, 4
      %s148 = scalar_lea.vmem %s0, %s147
      %p149 = pneg %p35
      %p150 = pneg %p32
      %p151 = pneg %p56
      %p152 = pneg %p53
      %p153 = pneg %p77
      %p154 = pneg %p74
      %p155 = pneg %p103
      %p156 = pneg %p100
      %s157 = smul.u32 16, %s14
      %p158 = scmp.lt.s32.totalorder %s157, 31
      %s159 = scalar_select %p158, %s157, 31
      %s160 = smul.addr %s159, 8
      %s161 = scalar_lea.vmem %s3, %s160
      %s162 = smul.u32 16, %s14
      %p163 = scmp.lt.s32.totalorder %s162, 31
      %s164 = scalar_select %p163, %s162, 31
      %s165 = smul.addr %s164, 4
      %s166 = scalar_lea.vmem %s0, %s165
      %s167 = smul.u32 16, %s14
      %s168 = smul.u32 16, %s14
      %p169 = scmp.lt.s32.totalorder %s168, 31
      %s170 = scalar_select %p169, %s168, 31
      %s171 = smul.addr %s170, 8
      %s172 = scalar_lea.vmem %s3, %s171
      %s173 = smul.u32 16, %s14
      %v175 = vld [vmem:[%s166] sm:$0xf]
      %v176 = vld [vmem:[%s166 + $0x4] sm:$0xf]
      %v177 = vld [vmem:[%s166 + $0x8] sm:$0xf]
      %v178 = vld [vmem:[%s166 + $0xc] sm:$0xf]
      %v179 = vld [vmem:[%s166 + $0x10] sm:$0xf]
      %v180 = vld [vmem:[%s166 + $0x14] sm:$0xf]
      %v181 = vld [vmem:[%s166 + $0x18] sm:$0xf]
      %v182 = vld [vmem:[%s166 + $0x1c] sm:$0xf]
      %v183 = vld [vmem:[%s166 + $0x20] sm:$0xf]
      %v184 = vld [vmem:[%s166 + $0x24] sm:$0xf]
      %v185 = vld [vmem:[%s166 + $0x28] sm:$0xf]
      %v186 = vld [vmem:[%s166 + $0x2c] sm:$0xf]
      %v187 = vld [vmem:[%s166 + $0x30] sm:$0xf]
      %v188 = vld [vmem:[%s166 + $0x34] sm:$0xf]
      %v189 = vld [vmem:[%s166 + $0x38] sm:$0xf]
      %v190 = vld [vmem:[%s166 + $0x3c] sm:$0xf]
      %v191 = vld [vmem:[%s1] sm:$0xf]
      %v192 = vld [vmem:[%s1 + $0x4] sm:$0xf]
      %v193 = vld [vmem:[%s1 + $0x8] sm:$0xf]
      %v194 = vld [vmem:[%s1 + $0xc] sm:$0xf]
      %v195 = vld [vmem:[%s2] sm:$0x1]
      %v197 = vlaneseq
      %v198 = vshrl.u32 %v197, 7
      %v199 = vsub.s32 0, %v198
      %v200 = vrot.slane %v195, %v199
      %v218 = vunpack.c.l.b16 %v175
      %v219 = vunpack.c.l.b16 %v176
      %v220 = vunpack.c.l.b16 %v177
      %v221 = vunpack.c.l.b16 %v178
      %v222 = vunpack.c.l.b16 %v179
      %v223 = vunpack.c.l.b16 %v180
      %v224 = vunpack.c.l.b16 %v181
      %v225 = vunpack.c.l.b16 %v182
      %v226 = vunpack.c.l.b16 %v183
      %v227 = vunpack.c.l.b16 %v184
      %v228 = vunpack.c.l.b16 %v185
      %v229 = vunpack.c.l.b16 %v186
      %v230 = vunpack.c.l.b16 %v187
      %v231 = vunpack.c.l.b16 %v188
      %v232 = vunpack.c.l.b16 %v189
      %v233 = vunpack.c.l.b16 %v190
      %v234 = vpack.c.b16 %v219, %v218
      %v235 = vpack.c.b16 %v221, %v220
      %v236 = vpack.c.b16 %v223, %v222
      %v237 = vpack.c.b16 %v225, %v224
      %v238 = vpack.c.b16 %v227, %v226
      %v239 = vpack.c.b16 %v229, %v228
      %v240 = vpack.c.b16 %v231, %v230
      %v241 = vpack.c.b16 %v233, %v232
      %v246 = vunpack.c.l.b16 %v191
      %v247 = vunpack.c.l.b16 %v192
      %v248 = vunpack.c.l.b16 %v193
      %v249 = vunpack.c.l.b16 %v194
      %v250 = vpack.c.b16 %v247, %v246
      %v251 = vpack.c.b16 %v249, %v248
      %vm254 = vcmask 261120
      %v256 = vsel %vm254, %v234, 0
      %v259 = vsel %vm254, %v235, 0
      %v262 = vsel %vm254, %v236, 0
      %v265 = vsel %vm254, %v237, 0
      %v268 = vsel %vm254, %v238, 0
      %v271 = vsel %vm254, %v239, 0
      %v274 = vsel %vm254, %v240, 0
      %v277 = vsel %vm254, %v241, 0
      %279 = vmatprep.subr.bf16.mxu0 0
      %280 = vmatpush1.bf16.msra.mxu0 %v250
      %281 = vmatprep.subr.bf16.mxu0 0
      %282 = vmatpush1.bf16.msra.mxu0 %v251
      %283 = vmatprep.subr.bf16.mxu0 0
      %284 = vmatpush1.bf16.msra.mxu0 0
      %285 = vmatprep.subr.bf16.mxu0 0
      %286 = vmatpush1.bf16.msra.mxu0 0
      %287 = vmatprep.subr.bf16.mxu0 0
      %288 = vmatpush1.bf16.msra.mxu0 0
      %289 = vmatprep.subr.bf16.mxu0 0
      %290 = vmatpush1.bf16.msra.mxu0 0
      %291 = vmatprep.subr.bf16.mxu0 0
      %292 = vmatpush1.bf16.msra.mxu0 0
      %293 = vmatprep.subr.bf16.mxu0 0
      %294 = vmatpush1.bf16.msra.mxu0 0
      %295 = vmatprep.subr.bf16.mxu0 0
      %296 = vmatpush1.bf16.msra.mxu0 0
      %297 = vmatprep.subr.bf16.mxu0 0
      %298 = vmatpush1.bf16.msra.mxu0 0
      %299 = vmatprep.subr.bf16.mxu0 0
      %300 = vmatpush1.bf16.msra.mxu0 0
      %301 = vmatprep.subr.bf16.mxu0 0
      %302 = vmatpush1.bf16.msra.mxu0 0
      %303 = vmatprep.subr.bf16.mxu0 0
      %304 = vmatpush1.bf16.msra.mxu0 0
      %305 = vmatprep.subr.bf16.mxu0 0
      %306 = vmatpush1.bf16.msra.mxu0 0
      %307 = vmatprep.subr.bf16.mxu0 0
      %308 = vmatpush1.bf16.msra.mxu0 0
      %309 = vmatprep.subr.bf16.mxu0 0
      %310 = vmatpush1.bf16.msra.mxu0 0
      %311 = vmatprep.mubr.bf16.mxu0 0
      %312 = vmatmul.mubr.bf16.gmra.mrb[0].mxu0 %v256
      %v313 = vpop.f32.mrb[0].mxu0
      %v314 = vadd.f32 %v200, %v313
      %v315 = vpop.f32.mrb[0].mxu0
      %v316 = vpop.f32.mrb[0].mxu0
      %v317 = vadd.f32 %v200, %v316
      %v318 = vpop.f32.mrb[0].mxu0
      %319 = vmatprep.mubr.bf16.mxu0 0
      %320 = vmatmul.mubr.bf16.gmra.mrb[0].mxu0 %v259
      %v321 = vpop.f32.mrb[0].mxu0
      %v322 = vadd.f32 %v200, %v321
      %v323 = vpop.f32.mrb[0].mxu0
      %v324 = vpop.f32.mrb[0].mxu0
      %v325 = vadd.f32 %v200, %v324
      %v326 = vpop.f32.mrb[0].mxu0
      %327 = vmatprep.mubr.bf16.mxu0 0
      %328 = vmatmul.mubr.bf16.gmra.mrb[0].mxu0 %v262
      %v329 = vpop.f32.mrb[0].mxu0
      %v330 = vadd.f32 %v200, %v329
      %v331 = vpop.f32.mrb[0].mxu0
      %v332 = vpop.f32.mrb[0].mxu0
      %v333 = vadd.f32 %v200, %v332
      %v334 = vpop.f32.mrb[0].mxu0
      %335 = vmatprep.mubr.bf16.mxu0 0
      %336 = vmatmul.mubr.bf16.gmra.mrb[0].mxu0 %v265
      %v337 = vpop.f32.mrb[0].mxu0
      %v338 = vadd.f32 %v200, %v337
      %v339 = vpop.f32.mrb[0].mxu0
      %v340 = vpop.f32.mrb[0].mxu0
      %v341 = vadd.f32 %v200, %v340
      %v342 = vpop.f32.mrb[0].mxu0
      %343 = vmatprep.mubr.bf16.mxu0 0
      %344 = vmatmul.mubr.bf16.gmra.mrb[0].mxu0 %v268
      %v345 = vpop.f32.mrb[0].mxu0
      %v346 = vadd.f32 %v200, %v345
      %v347 = vpop.f32.mrb[0].mxu0
      %v348 = vpop.f32.mrb[0].mxu0
      %v349 = vadd.f32 %v200, %v348
      %v350 = vpop.f32.mrb[0].mxu0
      %351 = vmatprep.mubr.bf16.mxu0 0
      %352 = vmatmul.mubr.bf16.gmra.mrb[0].mxu0 %v271
      %v353 = vpop.f32.mrb[0].mxu0
      %v354 = vadd.f32 %v200, %v353
      %v355 = vpop.f32.mrb[0].mxu0
      %v356 = vpop.f32.mrb[0].mxu0
      %v357 = vadd.f32 %v200, %v356
      %v358 = vpop.f32.mrb[0].mxu0
      %359 = vmatprep.mubr.bf16.mxu0 0
      %360 = vmatmul.mubr.bf16.gmra.mrb[0].mxu0 %v274
      %v361 = vpop.f32.mrb[0].mxu0
      %v362 = vadd.f32 %v200, %v361
      %v363 = vpop.f32.mrb[0].mxu0
      %v364 = vpop.f32.mrb[0].mxu0
      %v365 = vadd.f32 %v200, %v364
      %v366 = vpop.f32.mrb[0].mxu0
      %367 = vmatprep.mubr.bf16.mxu0 0
      %368 = vmatmul.mubr.bf16.gmra.mrb[0].mxu0 %v277
      %v369 = vpop.f32.mrb[0].mxu0
      %v370 = vadd.f32 %v200, %v369
      %v371 = vpop.f32.mrb[0].mxu0
      %v372 = vpop.f32.mrb[0].mxu0
      %v373 = vadd.f32 %v200, %v372
      %v374 = vpop.f32.mrb[0].mxu0
      %375 = vdwg.mxu0
      %v376 = vmax.f32 %v314, 0.0
      %v377 = vmax.f32 %v317, 0.0
      %v378 = vmax.f32 %v322, 0.0
      %v379 = vmax.f32 %v325, 0.0
      %v380 = vmax.f32 %v330, 0.0
      %v381 = vmax.f32 %v333, 0.0
      %v382 = vmax.f32 %v338, 0.0
      %v383 = vmax.f32 %v341, 0.0
      %v384 = vmax.f32 %v346, 0.0
      %v385 = vmax.f32 %v349, 0.0
      %v386 = vmax.f32 %v354, 0.0
      %v387 = vmax.f32 %v357, 0.0
      %v388 = vmax.f32 %v362, 0.0
      %v389 = vmax.f32 %v365, 0.0
      %v390 = vmax.f32 %v370, 0.0
      %v391 = vmax.f32 %v373, 0.0
      %vm392 = vcmask 523264
      %393 = vst.msk [vmem:[%s172] sm:$0xff] %vm392, %v376
      %394 = vst.msk [vmem:[%s172 + $0x8] sm:$0xff] %vm392, %v377
      %395 = vst.msk [vmem:[%s172 + $0x10] sm:$0xff] %vm392, %v378
      %396 = vst.msk [vmem:[%s172 + $0x18] sm:$0xff] %vm392, %v379
      %397 = vst.msk [vmem:[%s172 + $0x20] sm:$0xff] %vm392, %v380
      %398 = vst.msk [vmem:[%s172 + $0x28] sm:$0xff] %vm392, %v381
      %399 = vst.msk [vmem:[%s172 + $0x30] sm:$0xff] %vm392, %v382
      %400 = vst.msk [vmem:[%s172 + $0x38] sm:$0xff] %vm392, %v383
      %401 = vst.msk [vmem:[%s172 + $0x40] sm:$0xff] %vm392, %v384
      %402 = vst.msk [vmem:[%s172 + $0x48] sm:$0xff] %vm392, %v385
      %403 = vst.msk [vmem:[%s172 + $0x50] sm:$0xff] %vm392, %v386
      %404 = vst.msk [vmem:[%s172 + $0x58] sm:$0xff] %vm392, %v387
      %405 = vst.msk [vmem:[%s172 + $0x60] sm:$0xff] %vm392, %v388
      %406 = vst.msk [vmem:[%s172 + $0x68] sm:$0xff] %vm392, %v389
      %407 = vst.msk [vmem:[%s172 + $0x70] sm:$0xff] %vm392, %v390
      %408 = vst.msk [vmem:[%s172 + $0x78] sm:$0xff] %vm392, %v391
      %s409 = smul.u32 16, %s14
      %p410 = scmp.lt.s32.totalorder %s409, 31
      %s411 = scalar_select %p410, %s409, 31
      %s412 = smul.addr %s411, 8
      %s413 = scalar_lea.vmem %s3, %s412
      // Predicated region
      $region33: #{tpu_custom_call.1} parent=31 // pred_check
        %p414 = pneg %p100
      $region34: #{tpu_custom_call.1} parent=31 // pred_check_branch
        %416 = sbr.rel (%p414) target = $region36
      $region35: #{tpu_custom_call.1} parent=31 // pred_region
        %s417 = smul.u32 16, %s14
      $region36: #{tpu_custom_call.1} parent=31 // pred_fallthru
        _
    $region32: #{tpu_custom_call.1} parent=5 // pred_fallthru
      _
    %p418 = scmp.le.s32.totalorder 2, %s9
    // Predicated region
    $region37: #{tpu_custom_call.1} parent=5 // pred_check
      %p419 = pneg %p418
    $region38: #{tpu_custom_call.1} parent=5 // pred_check_branch
      %421 = sbr.rel (%p419) target = $region40
    $region39: #{tpu_custom_call.1} parent=5 // pred_region
      %s422 = ssub.s32 %s9, 2
      // Predicated region
      $region41: #{tpu_custom_call.1} parent=39 // pred_check
        %p423 = pneg %p106
      $region42: #{tpu_custom_call.1} parent=39 // pred_check_branch
        %425 = sbr.rel (%p423) target = $region44
      $region43: #{tpu_custom_call.1} parent=39 // pred_region
        %s426 = smul.u32 16, %s15
        %p427 = scmp.lt.s32.totalorder %s426, 31
        %s428 = scalar_select %p427, %s426, 31
        %s429 = smul.addr %s428, 8
        %s430 = scalar_lea.vmem %s3, %s429
      $region44: #{tpu_custom_call.1} parent=39 // pred_fallthru
        _
    $region40: #{tpu_custom_call.1} parent=5 // pred_fallthru
      _
  $region6: #{tpu_custom_call.1} parent=0 // loop_footer
    %s13 = sadd.s32 1, %s9
  $region7: #{tpu_custom_call.1} parent=0 // loop_footer_branch
    %8 = sbr.rel target = $region3
  $region8: #{tpu_custom_call.1} parent=0 // loop_exit
    _

// kernel: tpu_custom_call.1
$region0: #{tpu_custom_call.1}
  #allocation0 [shape = 'u32[]', space=smem, size = 0x4, offset = 0x4, fixed_abs, tag = 'smem constant byte address 0x4 - core index']
  #allocation1 [shape = 'u32[144,128]{1,0:T(1,128)}', space=vmem, size = 0x12000, scoped, tag = 'internal scratch']
  %s0 = inlined_call_operand.vmem [shape: bf16[256,32], index: 0, kind: input, shape index: {}]
  %s1 = inlined_call_operand.vmem [shape: bf16[32,64], index: 1, kind: input, shape index: {}]
  %s2 = inlined_call_operand.vmem [shape: f32[1,64], index: 2, kind: input, shape index: {}]
  %s3 = inlined_call_operand.vmem [shape: f32[256,64], index: 3, kind: output, shape index: {}]
  %s4 = sld [smem:[#allocation0]]
  $region45: #{tpu_custom_call.1} parent=0
    _
  %s6 = ssub.s32 1, %s4
  %s7 = scalar_select 0, %s6, %s4
  loop: start=0, step=1, limit=4
  $region2: #{tpu_custom_call.1} parent=0 // loop_pre_header
    _
  $region3: #{tpu_custom_call.1} parent=0 // loop_header
    %s9 = sphi 0, %s13
    %p10 = scmp.ge.s32.totalorder %s9, 4
    %s19 = sphi 0, %s21
    %s22 = sphi 0, %s19
    %s23 = sphi 0, %s22
    %s39 = sphi 0, %s23
    %s43 = sphi 0, %s43
    %s45 = sphi 0, %s43
    %s46 = sphi 0, %s45
    %s60 = sphi 0, %s46
    %s64 = sphi 0, %s64
    %s66 = sphi 0, %s64
    %s67 = sphi 0, %s66
    %s81 = sphi 0, %s67
    %s87 = sphi 0, %s89
    %s90 = sphi 0, %s87
    %s91 = sphi 0, %s90
    %s107 = sphi 0, %s91
  $region4: #{tpu_custom_call.1} parent=0 // loop_header_branch
    %12 = sbr.rel (%p10) target = $region8
  $region5: #{tpu_custom_call.1} parent=0 // loop_body
    %s14 = ssub.s32 %s9, 1
    %s15 = ssub.s32 %s9, 2
    %s16 = sadd.s32 %s9, 1
    %s17 = ssub.s32 %s9, %s16
    %p18 = scmp.eq.s32.totalorder %s17, 0
    %s20 = sadd.s32 %s19, 1
    %s21 = scalar_select %p18, %s19, %s20
    %p24 = pneg %p18
    %p25 = scmp.eq.s32.totalorder %s9, 1
    %p26 = por %p24, %p25
    %p27 = scmp.ne.s32.totalorder %s19, %s22
    %p28 = scmp.eq.s32.totalorder %s9, 0
    %p29 = por %p27, %p28
    %p30 = scmp.ne.s32.totalorder %s19, %s22
    %p31 = scmp.eq.s32.totalorder %s14, 1
    %p32 = por %p30, %p31
    %p33 = scmp.ne.s32.totalorder %s22, %s23
    %p34 = scmp.eq.s32.totalorder %s14, 0
    %p35 = por %p33, %p34
    %p36 = scmp.ne.s32.totalorder %s22, %s23
    %p37 = scmp.eq.s32.totalorder %s15, 1
    %p38 = por %p36, %p37
    %p40 = scmp.ne.s32.totalorder %s23, %s39
    %p41 = scmp.eq.s32.totalorder %s15, 0
    %p42 = por %p40, %p41
    %s44 = sadd.s32 %s43, 1
    %p47 = scmp.eq.s32.totalorder %s9, 1
    %p48 = scmp.ne.s32.totalorder %s43, %s45
    %p49 = scmp.eq.s32.totalorder %s9, 0
    %p50 = por %p48, %p49
    %p51 = scmp.ne.s32.totalorder %s43, %s45
    %p52 = scmp.eq.s32.totalorder %s14, 1
    %p53 = por %p51, %p52
    %p54 = scmp.ne.s32.totalorder %s45, %s46
    %p55 = scmp.eq.s32.totalorder %s14, 0
    %p56 = por %p54, %p55
    %p57 = scmp.ne.s32.totalorder %s45, %s46
    %p58 = scmp.eq.s32.totalorder %s15, 1
    %p59 = por %p57, %p58
    %p61 = scmp.ne.s32.totalorder %s46, %s60
    %p62 = scmp.eq.s32.totalorder %s15, 0
    %p63 = por %p61, %p62
    %s65 = sadd.s32 %s64, 1
    %p68 = scmp.eq.s32.totalorder %s9, 1
    %p69 = scmp.ne.s32.totalorder %s64, %s66
    %p70 = scmp.eq.s32.totalorder %s9, 0
    %p71 = por %p69, %p70
    %p72 = scmp.ne.s32.totalorder %s64, %s66
    %p73 = scmp.eq.s32.totalorder %s14, 1
    %p74 = por %p72, %p73
    %p75 = scmp.ne.s32.totalorder %s66, %s67
    %p76 = scmp.eq.s32.totalorder %s14, 0
    %p77 = por %p75, %p76
    %p78 = scmp.ne.s32.totalorder %s66, %s67
    %p79 = scmp.eq.s32.totalorder %s15, 1
    %p80 = por %p78, %p79
    %p82 = scmp.ne.s32.totalorder %s67, %s81
    %p83 = scmp.eq.s32.totalorder %s15, 0
    %p84 = por %p82, %p83
    %s85 = ssub.s32 %s9, %s16
    %p86 = scmp.eq.s32.totalorder %s85, 0
    %s88 = sadd.s32 %s87, 1
    %s89 = scalar_select %p86, %s87, %s88
    %p92 = pneg %p86
    %p93 = scmp.eq.s32.totalorder %s9, 1
    %p94 = por %p92, %p93
    %p95 = scmp.ne.s32.totalorder %s87, %s90
    %p96 = scmp.eq.s32.totalorder %s9, 0
    %p97 = por %p95, %p96
    %p98 = scmp.ne.s32.totalorder %s87, %s90
    %p99 = scmp.eq.s32.totalorder %s14, 1
    %p100 = por %p98, %p99
    %p101 = scmp.ne.s32.totalorder %s90, %s91
    %p102 = scmp.eq.s32.totalorder %s14, 0
    %p103 = por %p101, %p102
    %p104 = scmp.ne.s32.totalorder %s90, %s91
    %p105 = scmp.eq.s32.totalorder %s15, 1
    %p106 = por %p104, %p105
    %p108 = scmp.ne.s32.totalorder %s91, %s107
    %p109 = scmp.eq.s32.totalorder %s15, 0
    %p110 = por %p108, %p109
    %p111 = scmp.le.s32.totalorder 1, %s9
    %p112 = scmp.lt.s32.totalorder %s9, 3
    %p113 = pnand %p111, %p112
    %p114 = pneg %p113
    // Predicated region
    $region9: #{tpu_custom_call.1} parent=5 // pred_check
      _
    $region10: #{tpu_custom_call.1} parent=5 // pred_check_branch
      %116 = sbr.rel (%p113) target = $region12
    $region11: #{tpu_custom_call.1} parent=5 // pred_region
      %s117 = ssub.s32 %s9, 1
      // Predicated region
      $region13: #{tpu_custom_call.1} parent=11 // pred_check
        %p118 = pneg %p56
      $region14: #{tpu_custom_call.1} parent=11 // pred_check_branch
        %120 = sbr.rel (%p118) target = $region16
      $region15: #{tpu_custom_call.1} parent=11 // pred_region
        _
      $region16: #{tpu_custom_call.1} parent=11 // pred_fallthru
        _
      // Predicated region
      $region17: #{tpu_custom_call.1} parent=11 // pred_check
        %p121 = pneg %p77
      $region18: #{tpu_custom_call.1} parent=11 // pred_check_branch
        %123 = sbr.rel (%p121) target = $region20
      $region19: #{tpu_custom_call.1} parent=11 // pred_region
        _
      $region20: #{tpu_custom_call.1} parent=11 // pred_fallthru
        _
    $region12: #{tpu_custom_call.1} parent=5 // pred_fallthru
      _
    %p124 = scmp.lt.s32.totalorder %s9, 2
    // Predicated region
    $region21: #{tpu_custom_call.1} parent=5 // pred_check
      %p125 = pneg %p124
    $region22: #{tpu_custom_call.1} parent=5 // pred_check_branch
      %127 = sbr.rel (%p125) target = $region24
    $region23: #{tpu_custom_call.1} parent=5 // pred_region
      // Predicated region
      $region25: #{tpu_custom_call.1} parent=23 // pred_check
        %p128 = pneg %p29
      $region26: #{tpu_custom_call.1} parent=23 // pred_check_branch
        %130 = sbr.rel (%p128) target = $region28
      $region27: #{tpu_custom_call.1} parent=23 // pred_region
        %s131 = smul.u32 16, %s9
        %p132 = scmp.lt.s32.totalorder %s131, 31
        %s133 = scalar_select %p132, %s131, 31
        %s134 = smul.addr %s133, 4
        %s135 = scalar_lea.vmem %s0, %s134
        %s136 = smul.u32 16, %s9
      $region28: #{tpu_custom_call.1} parent=23 // pred_fallthru
        _
    $region24: #{tpu_custom_call.1} parent=5 // pred_fallthru
      _
    %p137 = scmp.le.s32.totalorder 1, %s9
    %p138 = scmp.lt.s32.totalorder %s9, 3
    %p139 = pnand %p137, %p138
    %p140 = pneg %p139
    // Predicated region
    $region29: #{tpu_custom_call.1} parent=5 // pred_check
      _
    $region30: #{tpu_custom_call.1} parent=5 // pred_check_branch
      %142 = sbr.rel (%p139) target = $region32
    $region31: #{tpu_custom_call.1} parent=5 // pred_region
      %s143 = ssub.s32 %s9, 1
      %s144 = smul.u32 16, %s14
      %p145 = scmp.lt.s32.totalorder %s144, 31
      %s146 = scalar_select %p145, %s144, 31
      %s147 = smul.addr %s146, 4
      %s148 = scalar_lea.vmem %s0, %s147
      %p149 = pneg %p35
      %p150 = pneg %p32
      %p151 = pneg %p56
      %p152 = pneg %p53
      %p153 = pneg %p77
      %p154 = pneg %p74
      %p155 = pneg %p103
      %p156 = pneg %p100
      %s157 = smul.u32 16, %s14
      %p158 = scmp.lt.s32.totalorder %s157, 31
      %s159 = scalar_select %p158, %s157, 31
      %s160 = smul.addr %s159, 8
      %s161 = scalar_lea.vmem %s3, %s160
      %s162 = smul.u32 16, %s14
      %p163 = scmp.lt.s32.totalorder %s162, 31
      %s164 = scalar_select %p163, %s162, 31
      %s165 = smul.addr %s164, 4
      %s166 = scalar_lea.vmem %s0, %s165
      %s167 = smul.u32 16, %s14
      %s168 = smul.u32 16, %s14
      %p169 = scmp.lt.s32.totalorder %s168, 31
      %s170 = scalar_select %p169, %s168, 31
      %s171 = smul.addr %s170, 8
      %s172 = scalar_lea.vmem %s3, %s171
      %s173 = smul.u32 16, %s14
      %v175 = vld [vmem:[%s166] sm:$0xf]
      %v176 = vld [vmem:[%s166 + $0x4] sm:$0xf]
      %v177 = vld [vmem:[%s166 + $0x8] sm:$0xf]
      %v178 = vld [vmem:[%s166 + $0xc] sm:$0xf]
      %v179 = vld [vmem:[%s166 + $0x10] sm:$0xf]
      %v180 = vld [vmem:[%s166 + $0x14] sm:$0xf]
      %v181 = vld [vmem:[%s166 + $0x18] sm:$0xf]
      %v182 = vld [vmem:[%s166 + $0x1c] sm:$0xf]
      %v183 = vld [vmem:[%s166 + $0x20] sm:$0xf]
      %v184 = vld [vmem:[%s166 + $0x24] sm:$0xf]
      %v185 = vld [vmem:[%s166 + $0x28] sm:$0xf]
      %v186 = vld [vmem:[%s166 + $0x2c] sm:$0xf]
      %v187 = vld [vmem:[%s166 + $0x30] sm:$0xf]
      %v188 = vld [vmem:[%s166 + $0x34] sm:$0xf]
      %v189 = vld [vmem:[%s166 + $0x38] sm:$0xf]
      %v190 = vld [vmem:[%s166 + $0x3c] sm:$0xf]
      %v191 = vld [vmem:[%s1] sm:$0xf]
      %v192 = vld [vmem:[%s1 + $0x4] sm:$0xf]
      %v193 = vld [vmem:[%s1 + $0x8] sm:$0xf]
      %v194 = vld [vmem:[%s1 + $0xc] sm:$0xf]
      %v195 = vld [vmem:[%s2] sm:$0x1]
      %v197 = vlaneseq
      %v198 = vshrl.u32 %v197, 7
      %v199 = vsub.s32 0, %v198
      %v200 = vrot.slane %v195, %v199
      %v218 = vunpack.c.l.b16 %v175
      %v219 = vunpack.c.l.b16 %v176
      %v220 = vunpack.c.l.b16 %v177
      %v221 = vunpack.c.l.b16 %v178
      %v222 = vunpack.c.l.b16 %v179
      %v223 = vunpack.c.l.b16 %v180
      %v224 = vunpack.c.l.b16 %v181
      %v225 = vunpack.c.l.b16 %v182
      %v226 = vunpack.c.l.b16 %v183
      %v227 = vunpack.c.l.b16 %v184
      %v228 = vunpack.c.l.b16 %v185
      %v229 = vunpack.c.l.b16 %v186
      %v230 = vunpack.c.l.b16 %v187
      %v231 = vunpack.c.l.b16 %v188
      %v232 = vunpack.c.l.b16 %v189
      %v233 = vunpack.c.l.b16 %v190
      %v234 = vpack.c.b16 %v219, %v218
      %v235 = vpack.c.b16 %v221, %v220
      %v236 = vpack.c.b16 %v223, %v222
      %v237 = vpack.c.b16 %v225, %v224
      %v238 = vpack.c.b16 %v227, %v226
      %v239 = vpack.c.b16 %v229, %v228
      %v240 = vpack.c.b16 %v231, %v230
      %v241 = vpack.c.b16 %v233, %v232
      %v246 = vunpack.c.l.b16 %v191
      %v247 = vunpack.c.l.b16 %v192
      %v248 = vunpack.c.l.b16 %v193
      %v249 = vunpack.c.l.b16 %v194
      %v250 = vpack.c.b16 %v247, %v246
      %v251 = vpack.c.b16 %v249, %v248
      %vm254 = vcmask 261120
      %v256 = vsel %vm254, %v234, 0
      %v259 = vsel %vm254, %v235, 0
      %v262 = vsel %vm254, %v236, 0
      %v265 = vsel %vm254, %v237, 0
      %v268 = vsel %vm254, %v238, 0
      %v271 = vsel %vm254, %v239, 0
      %v274 = vsel %vm254, %v240, 0
      %v277 = vsel %vm254, %v241, 0
      %279 = vmatprep.subr.bf16.mxu0 0
      %280 = vmatpush1.bf16.msra.mxu0 %v250
      %281 = vmatprep.subr.bf16.mxu0 0
      %282 = vmatpush1.bf16.msra.mxu0 %v251
      %283 = vmatprep.subr.bf16.mxu0 0
      %284 = vmatpush1.bf16.msra.mxu0 0
      %285 = vmatprep.subr.bf16.mxu0 0
      %286 = vmatpush1.bf16.msra.mxu0 0
      %287 = vmatprep.subr.bf16.mxu0 0
      %288 = vmatpush1.bf16.msra.mxu0 0
      %289 = vmatprep.subr.bf16.mxu0 0
      %290 = vmatpush1.bf16.msra.mxu0 0
      %291 = vmatprep.subr.bf16.mxu0 0
      %292 = vmatpush1.bf16.msra.mxu0 0
      %293 = vmatprep.subr.bf16.mxu0 0
      %294 = vmatpush1.bf16.msra.mxu0 0
      %295 = vmatprep.subr.bf16.mxu0 0
      %296 = vmatpush1.bf16.msra.mxu0 0
      %297 = vmatprep.subr.bf16.mxu0 0
      %298 = vmatpush1.bf16.msra.mxu0 0
      %299 = vmatprep.subr.bf16.mxu0 0
      %300 = vmatpush1.bf16.msra.mxu0 0
      %301 = vmatprep.subr.bf16.mxu0 0
      %302 = vmatpush1.bf16.msra.mxu0 0
      %303 = vmatprep.subr.bf16.mxu0 0
      %304 = vmatpush1.bf16.msra.mxu0 0
      %305 = vmatprep.subr.bf16.mxu0 0
      %306 = vmatpush1.bf16.msra.mxu0 0
      %307 = vmatprep.subr.bf16.mxu0 0
      %308 = vmatpush1.bf16.msra.mxu0 0
      %309 = vmatprep.subr.bf16.mxu0 0
      %310 = vmatpush1.bf16.msra.mxu0 0
      %311 = vmatprep.mubr.bf16.mxu0 0
      %312 = vmatmul.mubr.bf16.gmra.mrb[0].mxu0 %v256
      %v313 = vpop.f32.mrb[0].mxu0
      %v314 = vadd.f32 %v200, %v313
      %v315 = vpop.f32.mrb[0].mxu0
      %v316 = vpop.f32.mrb[0].mxu0
      %v317 = vadd.f32 %v200, %v316
      %v318 = vpop.f32.mrb[0].mxu0
      %319 = vmatprep.mubr.bf16.mxu0 0
      %320 = vmatmul.mubr.bf16.gmra.mrb[0].mxu0 %v259
      %v321 = vpop.f32.mrb[0].mxu0
      %v322 = vadd.f32 %v200, %v321
      %v323 = vpop.f32.mrb[0].mxu0
      %v324 = vpop.f32.mrb[0].mxu0
      %v325 = vadd.f32 %v200, %v324
      %v326 = vpop.f32.mrb[0].mxu0
      %327 = vmatprep.mubr.bf16.mxu0 0
      %328 = vmatmul.mubr.bf16.gmra.mrb[0].mxu0 %v262
      %v329 = vpop.f32.mrb[0].mxu0
      %v330 = vadd.f32 %v200, %v329
      %v331 = vpop.f32.mrb[0].mxu0
      %v332 = vpop.f32.mrb[0].mxu0
      %v333 = vadd.f32 %v200, %v332
      %v334 = vpop.f32.mrb[0].mxu0
      %335 = vmatprep.mubr.bf16.mxu0 0
      %336 = vmatmul.mubr.bf16.gmra.mrb[0].mxu0 %v265
      %v337 = vpop.f32.mrb[0].mxu0
      %v338 = vadd.f32 %v200, %v337
      %v339 = vpop.f32.mrb[0].mxu0
      %v340 = vpop.f32.mrb[0].mxu0
      %v341 = vadd.f32 %v200, %v340
      %v342 = vpop.f32.mrb[0].mxu0
      %343 = vmatprep.mubr.bf16.mxu0 0
      %344 = vmatmul.mubr.bf16.gmra.mrb[0].mxu0 %v268
      %v345 = vpop.f32.mrb[0].mxu0
      %v346 = vadd.f32 %v200, %v345
      %v347 = vpop.f32.mrb[0].mxu0
      %v348 = vpop.f32.mrb[0].mxu0
      %v349 = vadd.f32 %v200, %v348
      %v350 = vpop.f32.mrb[0].mxu0
      %351 = vmatprep.mubr.bf16.mxu0 0
      %352 = vmatmul.mubr.bf16.gmra.mrb[0].mxu0 %v271
      %v353 = vpop.f32.mrb[0].mxu0
      %v354 = vadd.f32 %v200, %v353
      %v355 = vpop.f32.mrb[0].mxu0
      %v356 = vpop.f32.mrb[0].mxu0
      %v357 = vadd.f32 %v200, %v356
      %v358 = vpop.f32.mrb[0].mxu0
      %359 = vmatprep.mubr.bf16.mxu0 0
      %360 = vmatmul.mubr.bf16.gmra.mrb[0].mxu0 %v274
      %v361 = vpop.f32.mrb[0].mxu0
      %v362 = vadd.f32 %v200, %v361
      %v363 = vpop.f32.mrb[0].mxu0
      %v364 = vpop.f32.mrb[0].mxu0
      %v365 = vadd.f32 %v200, %v364
      %v366 = vpop.f32.mrb[0].mxu0
      %367 = vmatprep.mubr.bf16.mxu0 0
      %368 = vmatmul.mubr.bf16.gmra.mrb[0].mxu0 %v277
      %v369 = vpop.f32.mrb[0].mxu0
      %v370 = vadd.f32 %v200, %v369
      %v371 = vpop.f32.mrb[0].mxu0
      %v372 = vpop.f32.mrb[0].mxu0
      %v373 = vadd.f32 %v200, %v372
      %v374 = vpop.f32.mrb[0].mxu0
      %375 = vdwg.mxu0
      %v376 = vmax.f32 %v314, 0.0
      %v377 = vmax.f32 %v317, 0.0
      %v378 = vmax.f32 %v322, 0.0
      %v379 = vmax.f32 %v325, 0.0
      %v380 = vmax.f32 %v330, 0.0
      %v381 = vmax.f32 %v333, 0.0
      %v382 = vmax.f32 %v338, 0.0
      %v383 = vmax.f32 %v341, 0.0
      %v384 = vmax.f32 %v346, 0.0
      %v385 = vmax.f32 %v349, 0.0
      %v386 = vmax.f32 %v354, 0.0
      %v387 = vmax.f32 %v357, 0.0
      %v388 = vmax.f32 %v362, 0.0
      %v389 = vmax.f32 %v365, 0.0
      %v390 = vmax.f32 %v370, 0.0
      %v391 = vmax.f32 %v373, 0.0
      %vm392 = vcmask 523264
      %393 = vst.msk [vmem:[%s172] sm:$0xff] %vm392, %v376
      %394 = vst.msk [vmem:[%s172 + $0x8] sm:$0xff] %vm392, %v377
      %395 = vst.msk [vmem:[%s172 + $0x10] sm:$0xff] %vm392, %v378
      %396 = vst.msk [vmem:[%s172 + $0x18] sm:$0xff] %vm392, %v379
      %397 = vst.msk [vmem:[%s172 + $0x20] sm:$0xff] %vm392, %v380
      %398 = vst.msk [vmem:[%s172 + $0x28] sm:$0xff] %vm392, %v381
      %399 = vst.msk [vmem:[%s172 + $0x30] sm:$0xff] %vm392, %v382
      %400 = vst.msk [vmem:[%s172 + $0x38] sm:$0xff] %vm392, %v383
      %401 = vst.msk [vmem:[%s172 + $0x40] sm:$0xff] %vm392, %v384
      %402 = vst.msk [vmem:[%s172 + $0x48] sm:$0xff] %vm392, %v385
      %403 = vst.msk [vmem:[%s172 + $0x50] sm:$0xff] %vm392, %v386
      %404 = vst.msk [vmem:[%s172 + $0x58] sm:$0xff] %vm392, %v387
      %405 = vst.msk [vmem:[%s172 + $0x60] sm:$0xff] %vm392, %v388
      %406 = vst.msk [vmem:[%s172 + $0x68] sm:$0xff] %vm392, %v389
      %407 = vst.msk [vmem:[%s172 + $0x70] sm:$0xff] %vm392, %v390
      %408 = vst.msk [vmem:[%s172 + $0x78] sm:$0xff] %vm392, %v391
      %s409 = smul.u32 16, %s14
      %p410 = scmp.lt.s32.totalorder %s409, 31
      %s411 = scalar_select %p410, %s409, 31
      %s412 = smul.addr %s411, 8
      %s413 = scalar_lea.vmem %s3, %s412
      // Predicated region
      $region33: #{tpu_custom_call.1} parent=31 // pred_check
        %p414 = pneg %p100
      $region34: #{tpu_custom_call.1} parent=31 // pred_check_branch
        %416 = sbr.rel (%p414) target = $region36
      $region35: #{tpu_custom_call.1} parent=31 // pred_region
        %s417 = smul.u32 16, %s14
      $region36: #{tpu_custom_call.1} parent=31 // pred_fallthru
        _
    $region32: #{tpu_custom_call.1} parent=5 // pred_fallthru
      _
    %p418 = scmp.le.s32.totalorder 2, %s9
    // Predicated region
    $region37: #{tpu_custom_call.1} parent=5 // pred_check
      %p419 = pneg %p418
    $region38: #{tpu_custom_call.1} parent=5 // pred_check_branch
      %421 = sbr.rel (%p419) target = $region40
    $region39: #{tpu_custom_call.1} parent=5 // pred_region
      %s422 = ssub.s32 %s9, 2
      // Predicated region
      $region41: #{tpu_custom_call.1} parent=39 // pred_check
        %p423 = pneg %p106
      $region42: #{tpu_custom_call.1} parent=39 // pred_check_branch
        %425 = sbr.rel (%p423) target = $region44
      $region43: #{tpu_custom_call.1} parent=39 // pred_region
        %s426 = smul.u32 16, %s15
        %p427 = scmp.lt.s32.totalorder %s426, 31
        %s428 = scalar_select %p427, %s426, 31
        %s429 = smul.addr %s428, 8
        %s430 = scalar_lea.vmem %s3, %s429
      $region44: #{tpu_custom_call.1} parent=39 // pred_fallthru
        _
    $region40: #{tpu_custom_call.1} parent=5 // pred_fallthru
      _
  $region6: #{tpu_custom_call.1} parent=0 // loop_footer
    %s13 = sadd.s32 1, %s9
  $region7: #{tpu_custom_call.1} parent=0 // loop_footer_branch
    %8 = sbr.rel target = $region3
  $region8: #{tpu_custom_call.1} parent=0 // loop_exit
    _

</llo_original>
